<compile_context>
chip_gen: v6e
topology: v6e:2x2x1
jax: 0.10.0
libtpu: 0.0.40
codegen_flags: <defaults>
</compile_context>

<pallas_src>
import jax
import jax.numpy as jnp
import numpy as np
from jax.experimental import pallas as pl
from jax.experimental.pallas import tpu as pltpu


# ----------------------------------------------------------------------------
# Fused kernel
# ----------------------------------------------------------------------------
def _self_att_aggregate_kernel(x_ref, w_ref, o_ref):
    """Fused SelfAttAggregate forward.

    x_ref: (B, T, C) hiddens, channel dim C lane-major.
    w_ref: (1, T)    the (agg_dim, 1) parameter presented as a row.
    o_ref: (B, 2C)   aggregated features (two identical halves, as in PyTorch).
    """
    B, T, C = x_ref.shape
    w_row = w_ref[...]                                           # (1, T)

    for b in range(B):                                           # static unroll (B tiny)
        feat = x_ref[b]                                          # (T, C)

        # agg_spatial = cat([avgpool, maxpool]) == cat([feat, feat]) because the
        # max/mean run over a size-1 dim  =>  energy = agg^T @ agg = 2*feat@feat^T.
        energy = 2.0 * jnp.einsum('tc,sc->ts', feat, feat,
                                  preferred_element_type=jnp.float32)   # (T, T)

        # Numerically-stable softmax over the last axis (matches nn.Softmax(-1)).
        e_max = jnp.max(energy, axis=-1, keepdims=True)
        p = jnp.exp(energy - e_max)
        att = p / jnp.sum(p, axis=-1, keepdims=True)                     # (T, T)

        # weighted_feat = att @ agg^T -> both C-halves identical; compute one.
        weighted = jnp.dot(att, feat,
                           preferred_element_type=jnp.float32)           # (T, C)

        # agg_feature = weighted^T @ w  ==  (w^T @ weighted)^T : one (1, C) row.
        row = jnp.dot(w_row, weighted,
                      preferred_element_type=jnp.float32)                # (1, C)
        half = row.astype(o_ref.dtype)

        # Store the two identical halves of the (1, 2C) output row.
        o_ref[pl.ds(b, 1), pl.ds(0, C)] = half
        o_ref[pl.ds(b, 1), pl.ds(C, C)] = half


def self_att_aggregate(hiddens, weight):
    """hiddens: (B, C, T) float; weight: (agg_dim, 1) with agg_dim == T.

    Returns the aggregated feature of shape (B, 2C)."""
    B, C, T = hiddens.shape
    assert weight.shape == (T, 1), (weight.shape, T)

    # Layout plumbing outside the kernel (a few KB): channel dim -> lanes.
    x_t = jnp.transpose(hiddens, (0, 2, 1)).astype(jnp.float32)   # (B, T, C)
    w_row = weight.reshape(1, T).astype(jnp.float32)              # (1, T)

    return pl.pallas_call(
        _self_att_aggregate_kernel,
        out_shape=jax.ShapeDtypeStruct((B, 2 * C), jnp.float32),
        in_specs=[
            pl.BlockSpec(memory_space=pltpu.MemorySpace.VMEM),
            pl.BlockSpec(memory_space=pltpu.MemorySpace.VMEM),
        ],
        out_specs=pl.BlockSpec(memory_space=pltpu.MemorySpace.VMEM),
    )(x_t, w_row)


# ----------------------------------------------------------------------------
# Literal pure-JAX transcription of the PyTorch forward (correctness check)
# ----------------------------------------------------------------------------
def self_att_aggregate_reference(hiddens, weight):
    B = hiddens.shape[0]
    h = jnp.transpose(hiddens[None], (1, 0, 2, 3))               # (B, 1, C, T)
    maxpool = jnp.max(h, axis=1)                                 # (B, C, T)
    avgpool = jnp.mean(h, axis=1)                                # (B, C, T)
    agg = jnp.concatenate([avgpool, maxpool], axis=1)            # (B, 2C, T)
    agg_t = jnp.transpose(agg, (0, 2, 1))                        # (B, T, 2C)
    energy = jnp.einsum('btc,bcs->bts', agg_t, agg)              # (B, T, T)
    attention = jax.nn.softmax(energy, axis=-1)
    weighted = jnp.einsum('bts,bsc->btc', attention, agg_t)      # (B, T, 2C)
    w = jnp.broadcast_to(weight[None], (B,) + weight.shape)      # (B, T, 1)
    agg_feature = jnp.einsum('bct,bto->bco',
                             jnp.transpose(weighted, (0, 2, 1)), w)  # (B, 2C, 1)
    return agg_feature[..., 0]                                   # (B, 2C)


if __name__ == "__main__":
    B, C, T = 2, 64, 8        # small shapes; agg_dim == T

    key = jax.random.PRNGKey(0)
    kx, kw = jax.random.split(key)
    hiddens = jax.random.normal(kx, (B, C, T), jnp.float32)
    # kaiming_normal_(a=sqrt(5)) on a (agg_dim, 1) tensor: fan_in=1,
    # gain=sqrt(2/(1+5))  ->  std = 1/sqrt(3).
    weight = jax.random.normal(kw, (T, 1), jnp.float32) / np.sqrt(3.0)

    fwd = jax.jit(self_att_aggregate)
    out = jax.block_until_ready(fwd(hiddens, weight))

    ref = self_att_aggregate_reference(hiddens, weight)
    np.testing.assert_allclose(np.asarray(out), np.asarray(ref),
                               rtol=1e-5, atol=1e-5)
    assert out.shape == (B, 2 * C)
    print("KERNEL_OK")
</pallas_src>

<mosaic_0001>
module attributes {stable_mosaic.version = 11 : i64} {
  func.func @_self_att_aggregate_kernel(%arg0: memref<2x8x64xf32, #tpu.memory_space<vmem>>, %arg1: memref<1x8xf32, #tpu.memory_space<vmem>>, %arg2: memref<2x128xf32, #tpu.memory_space<vmem>>) attributes {dimension_semantics = [], scalar_prefetch = 0 : i64, scratch_operands = 0 : i64, tpu.core_type = #tpu.core_type<tc>} {
    %c0 = arith.constant 0 : index
    %c0_0 = arith.constant 0 : index
    %0 = vector.load %arg1[%c0, %c0_0] : memref<1x8xf32, #tpu.memory_space<vmem>>, vector<1x8xf32>
    %c0_1 = arith.constant 0 : index
    %c0_2 = arith.constant 0 : index
    %c0_3 = arith.constant 0 : index
    %1 = vector.load %arg0[%c0_1, %c0_2, %c0_3] : memref<2x8x64xf32, #tpu.memory_space<vmem>>, vector<1x8x64xf32>
    %2 = vector.shape_cast %1 : vector<1x8x64xf32> to vector<8x64xf32>
    "tpu.trace_start"() <{level = 10 : i32, message = "tc,sc->ts"}> : () -> ()
    %cst = arith.constant dense<0.000000e+00> : vector<8x8xf32>
    %3 = tpu.matmul %2, %2, %cst {dimension_numbers = #tpu.dot_dimension_numbers<[1], [1], [0], [0], [0, 0, 1, 0], [], []>} : vector<8x64xf32>, vector<8x64xf32>, vector<8x8xf32> -> vector<8x8xf32>
    "tpu.trace_stop"() : () -> ()
    %cst_4 = arith.constant 2.000000e+00 : f32
    %4 = vector.broadcast %cst_4 : f32 to vector<8x8xf32>
    %5 = arith.mulf %4, %3 : vector<8x8xf32>
    %cst_5 = arith.constant dense<0xFF800000> : vector<8xf32>
    %6 = vector.multi_reduction <maximumf>, %5, %cst_5 [1] : vector<8x8xf32> to vector<8xf32>
    %7 = vector.shape_cast %6 : vector<8xf32> to vector<8x1xf32>
    %8 = vector.broadcast %7 : vector<8x1xf32> to vector<8x8xf32>
    %9 = arith.subf %5, %8 : vector<8x8xf32>
    %10 = math.exp %9 : vector<8x8xf32>
    %cst_6 = arith.constant dense<0.000000e+00> : vector<8xf32>
    %11 = vector.multi_reduction <add>, %10, %cst_6 [1] : vector<8x8xf32> to vector<8xf32>
    %12 = vector.shape_cast %11 : vector<8xf32> to vector<8x1xf32>
    %13 = vector.broadcast %12 : vector<8x1xf32> to vector<8x8xf32>
    %14 = arith.divf %10, %13 : vector<8x8xf32>
    %cst_7 = arith.constant dense<0.000000e+00> : vector<8x64xf32>
    %15 = tpu.matmul %14, %2, %cst_7 {dimension_numbers = #tpu.dot_dimension_numbers<[1], [0], [0], [1], [0, 0, 1, 1], [], []>} : vector<8x8xf32>, vector<8x64xf32>, vector<8x64xf32> -> vector<8x64xf32>
    %cst_8 = arith.constant dense<0.000000e+00> : vector<1x64xf32>
    %16 = tpu.matmul %0, %15, %cst_8 {dimension_numbers = #tpu.dot_dimension_numbers<[1], [0], [0], [1], [0, 0, 1, 1], [], []>} : vector<1x8xf32>, vector<8x64xf32>, vector<1x64xf32> -> vector<1x64xf32>
    %c0_9 = arith.constant 0 : index
    %c0_10 = arith.constant 0 : index
    %17 = vector.load %arg2[%c0_9, %c0_10] : memref<2x128xf32, #tpu.memory_space<vmem>>, vector<1x64xf32>
    tpu.vector_store %arg2[%c0_9, %c0_10], %16 {strides = array<i32>} : memref<2x128xf32, #tpu.memory_space<vmem>>, vector<1x64xf32>,
    %c0_11 = arith.constant 0 : index
    %c64 = arith.constant 64 : index
    %18 = vector.load %arg2[%c0_11, %c64] : memref<2x128xf32, #tpu.memory_space<vmem>>, vector<1x64xf32>
    tpu.vector_store %arg2[%c0_11, %c64], %16 {strides = array<i32>} : memref<2x128xf32, #tpu.memory_space<vmem>>, vector<1x64xf32>,
    %c1 = arith.constant 1 : index
    %c0_12 = arith.constant 0 : index
    %c0_13 = arith.constant 0 : index
    %19 = vector.load %arg0[%c1, %c0_12, %c0_13] : memref<2x8x64xf32, #tpu.memory_space<vmem>>, vector<1x8x64xf32>
    %20 = vector.shape_cast %19 : vector<1x8x64xf32> to vector<8x64xf32>
    "tpu.trace_start"() <{level = 10 : i32, message = "tc,sc->ts"}> : () -> ()
    %cst_14 = arith.constant dense<0.000000e+00> : vector<8x8xf32>
    %21 = tpu.matmul %20, %20, %cst_14 {dimension_numbers = #tpu.dot_dimension_numbers<[1], [1], [0], [0], [0, 0, 1, 0], [], []>} : vector<8x64xf32>, vector<8x64xf32>, vector<8x8xf32> -> vector<8x8xf32>
    "tpu.trace_stop"() : () -> ()
    %cst_15 = arith.constant 2.000000e+00 : f32
    %22 = vector.broadcast %cst_15 : f32 to vector<8x8xf32>
    %23 = arith.mulf %22, %21 : vector<8x8xf32>
    %cst_16 = arith.constant dense<0xFF800000> : vector<8xf32>
    %24 = vector.multi_reduction <maximumf>, %23, %cst_16 [1] : vector<8x8xf32> to vector<8xf32>
    %25 = vector.shape_cast %24 : vector<8xf32> to vector<8x1xf32>
    %26 = vector.broadcast %25 : vector<8x1xf32> to vector<8x8xf32>
    %27 = arith.subf %23, %26 : vector<8x8xf32>
    %28 = math.exp %27 : vector<8x8xf32>
    %cst_17 = arith.constant dense<0.000000e+00> : vector<8xf32>
    %29 = vector.multi_reduction <add>, %28, %cst_17 [1] : vector<8x8xf32> to vector<8xf32>
    %30 = vector.shape_cast %29 : vector<8xf32> to vector<8x1xf32>
    %31 = vector.broadcast %30 : vector<8x1xf32> to vector<8x8xf32>
    %32 = arith.divf %28, %31 : vector<8x8xf32>
    %cst_18 = arith.constant dense<0.000000e+00> : vector<8x64xf32>
    %33 = tpu.matmul %32, %20, %cst_18 {dimension_numbers = #tpu.dot_dimension_numbers<[1], [0], [0], [1], [0, 0, 1, 1], [], []>} : vector<8x8xf32>, vector<8x64xf32>, vector<8x64xf32> -> vector<8x64xf32>
    %cst_19 = arith.constant dense<0.000000e+00> : vector<1x64xf32>
    %34 = tpu.matmul %0, %33, %cst_19 {dimension_numbers = #tpu.dot_dimension_numbers<[1], [0], [0], [1], [0, 0, 1, 1], [], []>} : vector<1x8xf32>, vector<8x64xf32>, vector<1x64xf32> -> vector<1x64xf32>
    %c1_20 = arith.constant 1 : index
    %c0_21 = arith.constant 0 : index
    %35 = vector.load %arg2[%c1_20, %c0_21] : memref<2x128xf32, #tpu.memory_space<vmem>>, vector<1x64xf32>
    tpu.vector_store %arg2[%c1_20, %c0_21], %34 {strides = array<i32>} : memref<2x128xf32, #tpu.memory_space<vmem>>, vector<1x64xf32>,
    %c1_22 = arith.constant 1 : index
    %c64_23 = arith.constant 64 : index
    %36 = vector.load %arg2[%c1_22, %c64_23] : memref<2x128xf32, #tpu.memory_space<vmem>>, vector<1x64xf32>
    tpu.vector_store %arg2[%c1_22, %c64_23], %34 {strides = array<i32>} : memref<2x128xf32, #tpu.memory_space<vmem>>, vector<1x64xf32>,
    return
  }
}

</mosaic_0001>

<llo_original>
// kernel: self_att_aggregate.1
$region0: #{self_att_aggregate.1}
  #allocation0 [shape = 'u32[]', space=smem, size = 0x4, offset = 0x4, fixed_abs, tag = 'smem constant byte address 0x4 - core index']
  #allocation1 [shape = 'u32[144,128]{1,0:T(1,128)}', space=vmem, size = 0x12000, scoped, tag = 'internal scratch']
  %s0 = inlined_call_operand.hbm [shape: f32[2,8,64], index: 0, kind: input, shape index: {}]
  %s1 = inlined_call_operand.vmem [shape: f32[1,8], index: 1, kind: input, shape index: {}]
  %s2 = inlined_call_operand.hbm [shape: f32[2,128], index: 2, kind: output, shape index: {}]
  %s3 = sld [smem:[#allocation0]]
  $region22: #{self_att_aggregate.1} parent=0
    _
  %s5 = ssub.s32 1, %s3
  %s6 = scalar_select 0, %s5, %s3
  $region1: #{self_att_aggregate.1} parent=0
    #allocation2 [shape = 'u8[8192]{0}', space=vmem, size = 0x2000, scoped, tag = 'input window, operand 0, single buffered']
    #allocation3 [shape = 's32[1]{0}', space=sflag, size = 0x4, scoped, tag = 'scoped memory for self_att_aggregate.1']
    #allocation4 [shape = 's32[1]{0}', space=sflag, size = 0x4, scoped, tag = 'scoped memory for self_att_aggregate.1']
    #allocation5 [shape = 'u8[1024]{0}', space=vmem, size = 0x400, scoped, tag = 'output window, operand 0, single buffered']
    %7 = vsyncpa [#allocation3], 0
    %8 = vsyncpa [#allocation4], 0
    // Predicated region
    $region2: #{self_att_aggregate.1} parent=1 // pred_check
      _
    $region3: #{self_att_aggregate.1} parent=1 // pred_check_branch
      %10 = sbr.rel (0) target = $region5
    $region4: #{self_att_aggregate.1} parent=1 // pred_region
      %s12 = ssub.s32 256, 256
      %13 = vsyncadd [#allocation3], %s12
      %s14 = sshll.u32 [#allocation2], 4
      %s15 = int_to_ptr.vmem [resolvable:$true] %s14
      %20 = dma.hbm_to_vmem [thread:$0]  %s0, 256, %s15, [#allocation3], 128, 128, 8
    $region5: #{self_att_aggregate.1} parent=1 // pred_fallthru
      _
    // Predicated region
    $region6: #{self_att_aggregate.1} parent=1 // pred_check
      _
    $region7: #{self_att_aggregate.1} parent=1 // pred_check_branch
      %22 = sbr.rel (0) target = $region9
    $region8: #{self_att_aggregate.1} parent=1 // pred_region
      _
    $region9: #{self_att_aggregate.1} parent=1 // pred_fallthru
      _
    // Predicated region
    $region10: #{self_att_aggregate.1} parent=1 // pred_check
      _
    $region11: #{self_att_aggregate.1} parent=1 // pred_check_branch
      %24 = sbr.rel (0) target = $region13
    $region12: #{self_att_aggregate.1} parent=1 // pred_region
      %25 = dma.done [#allocation3], 256
    $region13: #{self_att_aggregate.1} parent=1 // pred_fallthru
      _
    %v26 = vld [vmem:[%s1] sm:$0x1]
    %v27 = vld [vmem:[#allocation2] sm:$0xff]
    %vm28 = vcmask 523264
    %v30 = vsel %vm28, %v27, 0
    %32 = vmatprep.subr.mxu0 0.0
    %33 = vmatpush1.xpose.msra.mxu0 0.0
    %34 = vmatprep.subr.mxu0 0.0
    %35 = vmatpush1.xpose.msra.mxu0 0.0
    %36 = vmatprep.subr.mxu0 0.0
    %37 = vmatpush1.xpose.msra.mxu0 0.0
    %38 = vmatprep.subr.mxu0 0.0
    %39 = vmatpush1.xpose.msra.mxu0 0.0
    %40 = vmatprep.subr.mxu0 0.0
    %41 = vmatpush1.xpose.msra.mxu0 0.0
    %42 = vmatprep.subr.mxu0 0.0
    %43 = vmatpush1.xpose.msra.mxu0 0.0
    %44 = vmatprep.subr.mxu0 0.0
    %45 = vmatpush1.xpose.msra.mxu0 0.0
    %46 = vmatprep.subr.mxu0 0.0
    %47 = vmatpush1.xpose.msra.mxu0 0.0
    %48 = vmatprep.subr.mxu0 0.0
    %49 = vmatpush1.xpose.msra.mxu0 0.0
    %50 = vmatprep.subr.mxu0 0.0
    %51 = vmatpush1.xpose.msra.mxu0 0.0
    %52 = vmatprep.subr.mxu0 0.0
    %53 = vmatpush1.xpose.msra.mxu0 0.0
    %54 = vmatprep.subr.mxu0 0.0
    %55 = vmatpush1.xpose.msra.mxu0 0.0
    %56 = vmatprep.subr.mxu0 0.0
    %57 = vmatpush1.xpose.msra.mxu0 0.0
    %58 = vmatprep.subr.mxu0 0.0
    %59 = vmatpush1.xpose.msra.mxu0 0.0
    %60 = vmatprep.subr.mxu0 0.0
    %61 = vmatpush1.xpose.msra.mxu0 0.0
    %62 = vmatprep.subr.mxu0 0.0
    %63 = vmatpush1.xpose.msra.mxu0 %v30
    %64 = vmatprep.subr.mxu0 0.0
    %65 = vmatpush2.xpose.msra.mxu0 0.0
    %66 = vmatprep.subr.mxu0 0.0
    %67 = vmatpush2.xpose.msra.mxu0 0.0
    %68 = vmatprep.subr.mxu0 0.0
    %69 = vmatpush2.xpose.msra.mxu0 0.0
    %70 = vmatprep.subr.mxu0 0.0
    %71 = vmatpush2.xpose.msra.mxu0 0.0
    %72 = vmatprep.subr.mxu0 0.0
    %73 = vmatpush2.xpose.msra.mxu0 0.0
    %74 = vmatprep.subr.mxu0 0.0
    %75 = vmatpush2.xpose.msra.mxu0 0.0
    %76 = vmatprep.subr.mxu0 0.0
    %77 = vmatpush2.xpose.msra.mxu0 0.0
    %78 = vmatprep.subr.mxu0 0.0
    %79 = vmatpush2.xpose.msra.mxu0 0.0
    %80 = vmatprep.subr.mxu0 0.0
    %81 = vmatpush2.xpose.msra.mxu0 0.0
    %82 = vmatprep.subr.mxu0 0.0
    %83 = vmatpush2.xpose.msra.mxu0 0.0
    %84 = vmatprep.subr.mxu0 0.0
    %85 = vmatpush2.xpose.msra.mxu0 0.0
    %86 = vmatprep.subr.mxu0 0.0
    %87 = vmatpush2.xpose.msra.mxu0 0.0
    %88 = vmatprep.subr.mxu0 0.0
    %89 = vmatpush2.xpose.msra.mxu0 0.0
    %90 = vmatprep.subr.mxu0 0.0
    %91 = vmatpush2.xpose.msra.mxu0 0.0
    %92 = vmatprep.subr.mxu0 0.0
    %93 = vmatpush2.xpose.msra.mxu0 0.0
    %94 = vmatprep.subr.mxu0 0.0
    %95 = vmatpush2.xpose.msra.mxu0 0.0
    %96 = vmatprep.mubr.f32.mxu0 0.0
    %97 = vmatmul.mubr.f32.gmra.mxu0 %v30
    %v98 = vpop.f32.mrf.mxu0
    %v99 = vadd.f32 0.0, %v98
    %v100 = vpop.f32.mrf.mxu0
    %101 = vdwg.mxu0
    %v102 = vmul.f32 %v99, 2.0
    %vm103 = vcmask 64512
    %v104 = vsel %vm103, %v102, -inf
    %105 = vmax.xlane.f32.xlu0 %v104
    %v106 = vpop.xlane.xlu0 %105
    %v107 = vsub.f32 %v102, %v106
    %v108 = vmul.f32 %v107, 1.442695
    %v109 = vpow.pop %v108
    %v110 = vsel %vm103, %v109, 0.0
    %111 = vadd.xlane.f32.xlu0 %v110
    %v112 = vpop.xlane.xlu0 %111
    %v113 = vrcp.pop %v112
    %v114 = vmul.f32 %v109, %v113
    %v116 = vsel %vm103, %v114, 0
    %118 = vmatprep.subr.mxu0 0.0
    %119 = vmatpush1.msra.mxu0 0.0
    %120 = vmatprep.subr.mxu0 0.0
    %121 = vmatpush1.msra.mxu0 0.0
    %122 = vmatprep.subr.mxu0 0.0
    %123 = vmatpush1.msra.mxu0 0.0
    %124 = vmatprep.subr.mxu0 0.0
    %125 = vmatpush1.msra.mxu0 0.0
    %126 = vmatprep.subr.mxu0 0.0
    %127 = vmatpush1.msra.mxu0 0.0
    %128 = vmatprep.subr.mxu0 0.0
    %129 = vmatpush1.msra.mxu0 0.0
    %130 = vmatprep.subr.mxu0 0.0
    %131 = vmatpush1.msra.mxu0 0.0
    %132 = vmatprep.subr.mxu0 0.0
    %133 = vmatpush1.msra.mxu0 0.0
    %134 = vmatprep.subr.mxu0 0.0
    %135 = vmatpush1.msra.mxu0 0.0
    %136 = vmatprep.subr.mxu0 0.0
    %137 = vmatpush1.msra.mxu0 0.0
    %138 = vmatprep.subr.mxu0 0.0
    %139 = vmatpush1.msra.mxu0 0.0
    %140 = vmatprep.subr.mxu0 0.0
    %141 = vmatpush1.msra.mxu0 0.0
    %142 = vmatprep.subr.mxu0 0.0
    %143 = vmatpush1.msra.mxu0 0.0
    %144 = vmatprep.subr.mxu0 0.0
    %145 = vmatpush1.msra.mxu0 0.0
    %146 = vmatprep.subr.mxu0 0.0
    %147 = vmatpush1.msra.mxu0 0.0
    %148 = vmatprep.subr.mxu0 0.0
    %149 = vmatpush1.msra.mxu0 %v27
    %150 = vmatprep.subr.mxu0 0.0
    %151 = vmatpush2.msra.mxu0 0.0
    %152 = vmatprep.subr.mxu0 0.0
    %153 = vmatpush2.msra.mxu0 0.0
    %154 = vmatprep.subr.mxu0 0.0
    %155 = vmatpush2.msra.mxu0 0.0
    %156 = vmatprep.subr.mxu0 0.0
    %157 = vmatpush2.msra.mxu0 0.0
    %158 = vmatprep.subr.mxu0 0.0
    %159 = vmatpush2.msra.mxu0 0.0
    %160 = vmatprep.subr.mxu0 0.0
    %161 = vmatpush2.msra.mxu0 0.0
    %162 = vmatprep.subr.mxu0 0.0
    %163 = vmatpush2.msra.mxu0 0.0
    %164 = vmatprep.subr.mxu0 0.0
    %165 = vmatpush2.msra.mxu0 0.0
    %166 = vmatprep.subr.mxu0 0.0
    %167 = vmatpush2.msra.mxu0 0.0
    %168 = vmatprep.subr.mxu0 0.0
    %169 = vmatpush2.msra.mxu0 0.0
    %170 = vmatprep.subr.mxu0 0.0
    %171 = vmatpush2.msra.mxu0 0.0
    %172 = vmatprep.subr.mxu0 0.0
    %173 = vmatpush2.msra.mxu0 0.0
    %174 = vmatprep.subr.mxu0 0.0
    %175 = vmatpush2.msra.mxu0 0.0
    %176 = vmatprep.subr.mxu0 0.0
    %177 = vmatpush2.msra.mxu0 0.0
    %178 = vmatprep.subr.mxu0 0.0
    %179 = vmatpush2.msra.mxu0 0.0
    %180 = vmatprep.subr.mxu0 0.0
    %181 = vmatpush2.msra.mxu0 0.0
    %182 = vmatprep.mubr.f32.mxu0 0.0
    %183 = vmatmul.mubr.f32.gmra.mxu0 %v116
    %v184 = vpop.f32.mrf.mxu0
    %v185 = vadd.f32 0.0, %v184
    %v186 = vpop.f32.mrf.mxu0
    %187 = vdwg.mxu0
    %v189 = vsel %vm103, %v26, 0
    %191 = vmatprep.subr.mxu0 0.0
    %192 = vmatpush1.msra.mxu0 0.0
    %193 = vmatprep.subr.mxu0 0.0
    %194 = vmatpush1.msra.mxu0 0.0
    %195 = vmatprep.subr.mxu0 0.0
    %196 = vmatpush1.msra.mxu0 0.0
    %197 = vmatprep.subr.mxu0 0.0
    %198 = vmatpush1.msra.mxu0 0.0
    %199 = vmatprep.subr.mxu0 0.0
    %200 = vmatpush1.msra.mxu0 0.0
    %201 = vmatprep.subr.mxu0 0.0
    %202 = vmatpush1.msra.mxu0 0.0
    %203 = vmatprep.subr.mxu0 0.0
    %204 = vmatpush1.msra.mxu0 0.0
    %205 = vmatprep.subr.mxu0 0.0
    %206 = vmatpush1.msra.mxu0 0.0
    %207 = vmatprep.subr.mxu0 0.0
    %208 = vmatpush1.msra.mxu0 0.0
    %209 = vmatprep.subr.mxu0 0.0
    %210 = vmatpush1.msra.mxu0 0.0
    %211 = vmatprep.subr.mxu0 0.0
    %212 = vmatpush1.msra.mxu0 0.0
    %213 = vmatprep.subr.mxu0 0.0
    %214 = vmatpush1.msra.mxu0 0.0
    %215 = vmatprep.subr.mxu0 0.0
    %216 = vmatpush1.msra.mxu0 0.0
    %217 = vmatprep.subr.mxu0 0.0
    %218 = vmatpush1.msra.mxu0 0.0
    %219 = vmatprep.subr.mxu0 0.0
    %220 = vmatpush1.msra.mxu0 0.0
    %221 = vmatprep.subr.mxu0 0.0
    %222 = vmatpush1.msra.mxu0 %v185
    %223 = vmatprep.subr.mxu0 0.0
    %224 = vmatpush2.msra.mxu0 0.0
    %225 = vmatprep.subr.mxu0 0.0
    %226 = vmatpush2.msra.mxu0 0.0
    %227 = vmatprep.subr.mxu0 0.0
    %228 = vmatpush2.msra.mxu0 0.0
    %229 = vmatprep.subr.mxu0 0.0
    %230 = vmatpush2.msra.mxu0 0.0
    %231 = vmatprep.subr.mxu0 0.0
    %232 = vmatpush2.msra.mxu0 0.0
    %233 = vmatprep.subr.mxu0 0.0
    %234 = vmatpush2.msra.mxu0 0.0
    %235 = vmatprep.subr.mxu0 0.0
    %236 = vmatpush2.msra.mxu0 0.0
    %237 = vmatprep.subr.mxu0 0.0
    %238 = vmatpush2.msra.mxu0 0.0
    %239 = vmatprep.subr.mxu0 0.0
    %240 = vmatpush2.msra.mxu0 0.0
    %241 = vmatprep.subr.mxu0 0.0
    %242 = vmatpush2.msra.mxu0 0.0
    %243 = vmatprep.subr.mxu0 0.0
    %244 = vmatpush2.msra.mxu0 0.0
    %245 = vmatprep.subr.mxu0 0.0
    %246 = vmatpush2.msra.mxu0 0.0
    %247 = vmatprep.subr.mxu0 0.0
    %248 = vmatpush2.msra.mxu0 0.0
    %249 = vmatprep.subr.mxu0 0.0
    %250 = vmatpush2.msra.mxu0 0.0
    %251 = vmatprep.subr.mxu0 0.0
    %252 = vmatpush2.msra.mxu0 0.0
    %253 = vmatprep.subr.mxu0 0.0
    %254 = vmatpush2.msra.mxu0 0.0
    %255 = vmatprep.mubr.f32.mxu0 0.0
    %256 = vmatmul.mubr.f32.gmra.mxu0 %v189
    %v257 = vpop.f32.mrf.mxu0
    %v258 = vadd.f32 0.0, %v257
    %v259 = vpop.f32.mrf.mxu0
    %260 = vdwg.mxu0
    %vm261 = vcmask 516096
    %262 = vst.msk [vmem:[#allocation5] sm:$0x1] %vm261, %v258
    %264 = vrot.lane.b32.xlu0 %v258, 64
    %v265 = vpop.permute.xlu0 %264
    %vm267 = vcmask 1040896
    %268 = vst.msk [vmem:[#allocation5] sm:$0x1] %vm267, %v265
    %s269 = scalar_lea.vmem [#allocation2], 8
    %v270 = vld [vmem:[%s269] sm:$0xff]
    %v272 = vsel %vm28, %v270, 0
    %274 = vmatprep.subr.mxu0 0.0
    %275 = vmatpush1.xpose.msra.mxu0 0.0
    %276 = vmatprep.subr.mxu0 0.0
    %277 = vmatpush1.xpose.msra.mxu0 0.0
    %278 = vmatprep.subr.mxu0 0.0
    %279 = vmatpush1.xpose.msra.mxu0 0.0
    %280 = vmatprep.subr.mxu0 0.0
    %281 = vmatpush1.xpose.msra.mxu0 0.0
    %282 = vmatprep.subr.mxu0 0.0
    %283 = vmatpush1.xpose.msra.mxu0 0.0
    %284 = vmatprep.subr.mxu0 0.0
    %285 = vmatpush1.xpose.msra.mxu0 0.0
    %286 = vmatprep.subr.mxu0 0.0
    %287 = vmatpush1.xpose.msra.mxu0 0.0
    %288 = vmatprep.subr.mxu0 0.0
    %289 = vmatpush1.xpose.msra.mxu0 0.0
    %290 = vmatprep.subr.mxu0 0.0
    %291 = vmatpush1.xpose.msra.mxu0 0.0
    %292 = vmatprep.subr.mxu0 0.0
    %293 = vmatpush1.xpose.msra.mxu0 0.0
    %294 = vmatprep.subr.mxu0 0.0
    %295 = vmatpush1.xpose.msra.mxu0 0.0
    %296 = vmatprep.subr.mxu0 0.0
    %297 = vmatpush1.xpose.msra.mxu0 0.0
    %298 = vmatprep.subr.mxu0 0.0
    %299 = vmatpush1.xpose.msra.mxu0 0.0
    %300 = vmatprep.subr.mxu0 0.0
    %301 = vmatpush1.xpose.msra.mxu0 0.0
    %302 = vmatprep.subr.mxu0 0.0
    %303 = vmatpush1.xpose.msra.mxu0 0.0
    %304 = vmatprep.subr.mxu0 0.0
    %305 = vmatpush1.xpose.msra.mxu0 %v272
    %306 = vmatprep.subr.mxu0 0.0
    %307 = vmatpush2.xpose.msra.mxu0 0.0
    %308 = vmatprep.subr.mxu0 0.0
    %309 = vmatpush2.xpose.msra.mxu0 0.0
    %310 = vmatprep.subr.mxu0 0.0
    %311 = vmatpush2.xpose.msra.mxu0 0.0
    %312 = vmatprep.subr.mxu0 0.0
    %313 = vmatpush2.xpose.msra.mxu0 0.0
    %314 = vmatprep.subr.mxu0 0.0
    %315 = vmatpush2.xpose.msra.mxu0 0.0
    %316 = vmatprep.subr.mxu0 0.0
    %317 = vmatpush2.xpose.msra.mxu0 0.0
    %318 = vmatprep.subr.mxu0 0.0
    %319 = vmatpush2.xpose.msra.mxu0 0.0
    %320 = vmatprep.subr.mxu0 0.0
    %321 = vmatpush2.xpose.msra.mxu0 0.0
    %322 = vmatprep.subr.mxu0 0.0
    %323 = vmatpush2.xpose.msra.mxu0 0.0
    %324 = vmatprep.subr.mxu0 0.0
    %325 = vmatpush2.xpose.msra.mxu0 0.0
    %326 = vmatprep.subr.mxu0 0.0
    %327 = vmatpush2.xpose.msra.mxu0 0.0
    %328 = vmatprep.subr.mxu0 0.0
    %329 = vmatpush2.xpose.msra.mxu0 0.0
    %330 = vmatprep.subr.mxu0 0.0
    %331 = vmatpush2.xpose.msra.mxu0 0.0
    %332 = vmatprep.subr.mxu0 0.0
    %333 = vmatpush2.xpose.msra.mxu0 0.0
    %334 = vmatprep.subr.mxu0 0.0
    %335 = vmatpush2.xpose.msra.mxu0 0.0
    %336 = vmatprep.subr.mxu0 0.0
    %337 = vmatpush2.xpose.msra.mxu0 0.0
    %338 = vmatprep.mubr.f32.mxu0 0.0
    %339 = vmatmul.mubr.f32.gmra.mxu0 %v272
    %v340 = vpop.f32.mrf.mxu0
    %v341 = vadd.f32 0.0, %v340
    %v342 = vpop.f32.mrf.mxu0
    %343 = vdwg.mxu0
    %v344 = vmul.f32 %v341, 2.0
    %v345 = vsel %vm103, %v344, -inf
    %346 = vmax.xlane.f32.xlu0 %v345
    %v347 = vpop.xlane.xlu0 %346
    %v348 = vsub.f32 %v344, %v347
    %v349 = vmul.f32 %v348, 1.442695
    %v350 = vpow.pop %v349
    %v351 = vsel %vm103, %v350, 0.0
    %352 = vadd.xlane.f32.xlu0 %v351
    %v353 = vpop.xlane.xlu0 %352
    %v354 = vrcp.pop %v353
    %v355 = vmul.f32 %v350, %v354
    %v357 = vsel %vm103, %v355, 0
    %359 = vmatprep.subr.mxu0 0.0
    %360 = vmatpush1.msra.mxu0 0.0
    %361 = vmatprep.subr.mxu0 0.0
    %362 = vmatpush1.msra.mxu0 0.0
    %363 = vmatprep.subr.mxu0 0.0
    %364 = vmatpush1.msra.mxu0 0.0
    %365 = vmatprep.subr.mxu0 0.0
    %366 = vmatpush1.msra.mxu0 0.0
    %367 = vmatprep.subr.mxu0 0.0
    %368 = vmatpush1.msra.mxu0 0.0
    %369 = vmatprep.subr.mxu0 0.0
    %370 = vmatpush1.msra.mxu0 0.0
    %371 = vmatprep.subr.mxu0 0.0
    %372 = vmatpush1.msra.mxu0 0.0
    %373 = vmatprep.subr.mxu0 0.0
    %374 = vmatpush1.msra.mxu0 0.0
    %375 = vmatprep.subr.mxu0 0.0
    %376 = vmatpush1.msra.mxu0 0.0
    %377 = vmatprep.subr.mxu0 0.0
    %378 = vmatpush1.msra.mxu0 0.0
    %379 = vmatprep.subr.mxu0 0.0
    %380 = vmatpush1.msra.mxu0 0.0
    %381 = vmatprep.subr.mxu0 0.0
    %382 = vmatpush1.msra.mxu0 0.0
    %383 = vmatprep.subr.mxu0 0.0
    %384 = vmatpush1.msra.mxu0 0.0
    %385 = vmatprep.subr.mxu0 0.0
    %386 = vmatpush1.msra.mxu0 0.0
    %387 = vmatprep.subr.mxu0 0.0
    %388 = vmatpush1.msra.mxu0 0.0
    %389 = vmatprep.subr.mxu0 0.0
    %390 = vmatpush1.msra.mxu0 %v270
    %391 = vmatprep.subr.mxu0 0.0
    %392 = vmatpush2.msra.mxu0 0.0
    %393 = vmatprep.subr.mxu0 0.0
    %394 = vmatpush2.msra.mxu0 0.0
    %395 = vmatprep.subr.mxu0 0.0
    %396 = vmatpush2.msra.mxu0 0.0
    %397 = vmatprep.subr.mxu0 0.0
    %398 = vmatpush2.msra.mxu0 0.0
    %399 = vmatprep.subr.mxu0 0.0
    %400 = vmatpush2.msra.mxu0 0.0
    %401 = vmatprep.subr.mxu0 0.0
    %402 = vmatpush2.msra.mxu0 0.0
    %403 = vmatprep.subr.mxu0 0.0
    %404 = vmatpush2.msra.mxu0 0.0
    %405 = vmatprep.subr.mxu0 0.0
    %406 = vmatpush2.msra.mxu0 0.0
    %407 = vmatprep.subr.mxu0 0.0
    %408 = vmatpush2.msra.mxu0 0.0
    %409 = vmatprep.subr.mxu0 0.0
    %410 = vmatpush2.msra.mxu0 0.0
    %411 = vmatprep.subr.mxu0 0.0
    %412 = vmatpush2.msra.mxu0 0.0
    %413 = vmatprep.subr.mxu0 0.0
    %414 = vmatpush2.msra.mxu0 0.0
    %415 = vmatprep.subr.mxu0 0.0
    %416 = vmatpush2.msra.mxu0 0.0
    %417 = vmatprep.subr.mxu0 0.0
    %418 = vmatpush2.msra.mxu0 0.0
    %419 = vmatprep.subr.mxu0 0.0
    %420 = vmatpush2.msra.mxu0 0.0
    %421 = vmatprep.subr.mxu0 0.0
    %422 = vmatpush2.msra.mxu0 0.0
    %423 = vmatprep.mubr.f32.mxu0 0.0
    %424 = vmatmul.mubr.f32.gmra.mxu0 %v357
    %v425 = vpop.f32.mrf.mxu0
    %v426 = vadd.f32 0.0, %v425
    %v427 = vpop.f32.mrf.mxu0
    %428 = vdwg.mxu0
    %429 = vmatprep.subr.mxu0 0.0
    %430 = vmatpush1.msra.mxu0 0.0
    %431 = vmatprep.subr.mxu0 0.0
    %432 = vmatpush1.msra.mxu0 0.0
    %433 = vmatprep.subr.mxu0 0.0
    %434 = vmatpush1.msra.mxu0 0.0
    %435 = vmatprep.subr.mxu0 0.0
    %436 = vmatpush1.msra.mxu0 0.0
    %437 = vmatprep.subr.mxu0 0.0
    %438 = vmatpush1.msra.mxu0 0.0
    %439 = vmatprep.subr.mxu0 0.0
    %440 = vmatpush1.msra.mxu0 0.0
    %441 = vmatprep.subr.mxu0 0.0
    %442 = vmatpush1.msra.mxu0 0.0
    %443 = vmatprep.subr.mxu0 0.0
    %444 = vmatpush1.msra.mxu0 0.0
    %445 = vmatprep.subr.mxu0 0.0
    %446 = vmatpush1.msra.mxu0 0.0
    %447 = vmatprep.subr.mxu0 0.0
    %448 = vmatpush1.msra.mxu0 0.0
    %449 = vmatprep.subr.mxu0 0.0
    %450 = vmatpush1.msra.mxu0 0.0
    %451 = vmatprep.subr.mxu0 0.0
    %452 = vmatpush1.msra.mxu0 0.0
    %453 = vmatprep.subr.mxu0 0.0
    %454 = vmatpush1.msra.mxu0 0.0
    %455 = vmatprep.subr.mxu0 0.0
    %456 = vmatpush1.msra.mxu0 0.0
    %457 = vmatprep.subr.mxu0 0.0
    %458 = vmatpush1.msra.mxu0 0.0
    %459 = vmatprep.subr.mxu0 0.0
    %460 = vmatpush1.msra.mxu0 %v426
    %461 = vmatprep.subr.mxu0 0.0
    %462 = vmatpush2.msra.mxu0 0.0
    %463 = vmatprep.subr.mxu0 0.0
    %464 = vmatpush2.msra.mxu0 0.0
    %465 = vmatprep.subr.mxu0 0.0
    %466 = vmatpush2.msra.mxu0 0.0
    %467 = vmatprep.subr.mxu0 0.0
    %468 = vmatpush2.msra.mxu0 0.0
    %469 = vmatprep.subr.mxu0 0.0
    %470 = vmatpush2.msra.mxu0 0.0
    %471 = vmatprep.subr.mxu0 0.0
    %472 = vmatpush2.msra.mxu0 0.0
    %473 = vmatprep.subr.mxu0 0.0
    %474 = vmatpush2.msra.mxu0 0.0
    %475 = vmatprep.subr.mxu0 0.0
    %476 = vmatpush2.msra.mxu0 0.0
    %477 = vmatprep.subr.mxu0 0.0
    %478 = vmatpush2.msra.mxu0 0.0
    %479 = vmatprep.subr.mxu0 0.0
    %480 = vmatpush2.msra.mxu0 0.0
    %481 = vmatprep.subr.mxu0 0.0
    %482 = vmatpush2.msra.mxu0 0.0
    %483 = vmatprep.subr.mxu0 0.0
    %484 = vmatpush2.msra.mxu0 0.0
    %485 = vmatprep.subr.mxu0 0.0
    %486 = vmatpush2.msra.mxu0 0.0
    %487 = vmatprep.subr.mxu0 0.0
    %488 = vmatpush2.msra.mxu0 0.0
    %489 = vmatprep.subr.mxu0 0.0
    %490 = vmatpush2.msra.mxu0 0.0
    %491 = vmatprep.subr.mxu0 0.0
    %492 = vmatpush2.msra.mxu0 0.0
    %493 = vmatprep.mubr.f32.mxu0 0.0
    %494 = vmatmul.mubr.f32.gmra.mxu0 %v189
    %v495 = vpop.f32.mrf.mxu0
    %v496 = vadd.f32 0.0, %v495
    %v497 = vpop.f32.mrf.mxu0
    %498 = vdwg.mxu0
    %499 = vst.msk [vmem:[#allocation5 + $0x1] sm:$0x1] %vm261, %v496
    %501 = vrot.lane.b32.xlu0 %v496, 64
    %v502 = vpop.permute.xlu0 %501
    %504 = vst.msk [vmem:[#allocation5 + $0x1] sm:$0x1] %vm267, %v502
    // Predicated region
    $region14: #{self_att_aggregate.1} parent=1 // pred_check
      _
    $region15: #{self_att_aggregate.1} parent=1 // pred_check_branch
      %506 = sbr.rel (0) target = $region17
    $region16: #{self_att_aggregate.1} parent=1 // pred_region
      %s508 = ssub.s32 32, 32
      %509 = vsyncadd [#allocation4], %s508
      %s511 = sshll.u32 [#allocation5], 4
      %s512 = int_to_ptr.vmem [resolvable:$true] %s511
      %514 = dma.vmem_to_hbm [thread:$0]  %s512, 32, %s2, [#allocation4]
    $region17: #{self_att_aggregate.1} parent=1 // pred_fallthru
      _
    // Predicated region
    $region18: #{self_att_aggregate.1} parent=1 // pred_check
      _
    $region19: #{self_att_aggregate.1} parent=1 // pred_check_branch
      %516 = sbr.rel (0) target = $region21
    $region20: #{self_att_aggregate.1} parent=1 // pred_region
      %517 = dma.done [#allocation4], 32
    $region21: #{self_att_aggregate.1} parent=1 // pred_fallthru
      _
    %518 = vsyncpa [#allocation3], 1
    %519 = vsyncpa [#allocation4], 1

</llo_original>
